<compile_context>
chip_gen: v5e
topology: v5e:2x2
jax: 0.10.0
libtpu: 0.0.40
codegen_flags: <defaults>
</compile_context>

<pallas_src>
import numpy as np
import jax
import jax.numpy as jnp
from jax import lax
from jax.experimental import pallas as pl
from jax.experimental.pallas import tpu as pltpu


def _round_up(x, m):
    return ((x + m - 1) // m) * m


def _compiler_params(semantics, est_bytes):
    # Explicit scoped-VMEM request: defaults are 16 MiB (v5e) / 32 MiB
    # (v6e/v7x); cap at 64 MiB (v7x physical VMEM per TC).
    limit = int(min(64 << 20, max(8 << 20, 2 * est_bytes)))
    return pltpu.CompilerParams(dimension_semantics=semantics,
                                vmem_limit_bytes=limit)


# ----------------------- generic fused matmul + bias ------------------------

def _matmul_bias_kernel(x_ref, w_ref, b_ref, o_ref):
    # x is cast per row-tile; w arrives pre-cast to bf16 from the wrapper so
    # the index-invariant weight block is not re-cast on every grid step.
    x = x_ref[...].astype(jnp.bfloat16)
    o_ref[...] = (jnp.dot(x, w_ref[...], preferred_element_type=jnp.float32)
                  + b_ref[...])


def matmul_bias(x, w, b, block_m=512, block_n=512):
    """(M, D) @ (D, N) + (1, N) -> (M, N), f32 out, bf16 MXU operands.

    Grid tiles rows (M) and lanes (N); both axes "parallel" so megacore can
    shard them.  N is padded to a multiple of 128 for lane-dense stores; the
    weight is cast to bf16 once here (halves its HBM->VMEM DMA bytes).
    """
    M, D = x.shape
    N = w.shape[1]
    w = w.astype(jnp.bfloat16)

    n128 = _round_up(N, 128)
    bn = min(block_n, n128)
    n_pad = _round_up(n128, bn)
    if n_pad != N:
        w = jnp.pad(w, ((0, 0), (0, n_pad - N)))
        b = jnp.pad(b, ((0, 0), (0, n_pad - N)))

    bm = min(block_m, _round_up(M, 8))
    m_pad = _round_up(M, bm)
    if m_pad != M:
        x = jnp.pad(x, ((0, m_pad - M), (0, 0)))

    est = 2 * (bm * D * 4 + D * bn * 2 + bn * 4 + bm * bn * 4)
    out = pl.pallas_call(
        _matmul_bias_kernel,
        out_shape=jax.ShapeDtypeStruct((m_pad, n_pad), jnp.float32),
        grid=(m_pad // bm, n_pad // bn),
        in_specs=[
            pl.BlockSpec((bm, D), lambda i, j: (i, 0)),
            pl.BlockSpec((D, bn), lambda i, j: (0, j)),
            pl.BlockSpec((1, bn), lambda i, j: (0, j)),
        ],
        out_specs=pl.BlockSpec((bm, bn), lambda i, j: (i, j)),
        compiler_params=_compiler_params(("parallel", "parallel"), est),
    )(x, w, b)
    return out[:M, :N]


# --------------------------- BiLSTM recurrence ------------------------------

def _bilstm_rec_kernel(pg_ref, whh_ref, out_ref):
    """Bidirectional LSTM recurrence for one batch block.

    pg_ref  : (T, BB, 8H) f32 pre-gates (x @ [W_ih_f|W_ih_b] + bias),
              time-major; columns [:4H] = forward gates, [4H:] = backward,
              PyTorch gate order (i, f, g, o) within each direction.
    whh_ref : (2H, 8H) f32 block-diagonal [[Whh_f, 0], [0, Whh_b]] so the two
              per-step recurrent matmuls fuse into ONE MXU push.
    out_ref : (T, BB, 2H) f32; [..., :H] = forward h_t, [..., H:] = backward.
    """
    T, BB, _ = pg_ref.shape
    H = whh_ref.shape[0] // 2

    # Hoisted out of the serial loop; kept f32 (rounding compounds over T).
    whh = whh_ref[...]

    def cell(pre, c):
        i = jax.nn.sigmoid(pre[:, 0:H])
        f = jax.nn.sigmoid(pre[:, H:2 * H])
        g = jnp.tanh(pre[:, 2 * H:3 * H])
        o = jax.nn.sigmoid(pre[:, 3 * H:4 * H])
        c_new = f * c + i * g
        h_new = o * jnp.tanh(c_new)
        return h_new, c_new

    def body(t, carry):
        h2, c_f, c_b = carry
        tb = T - 1 - t
        rec = jnp.dot(h2, whh, preferred_element_type=jnp.float32)  # (BB, 8H)
        g_f = pg_ref[t][:, :4 * H] + rec[:, :4 * H]
        g_b = pg_ref[tb][:, 4 * H:] + rec[:, 4 * H:]
        h_f, c_f = cell(g_f, c_f)
        h_b, c_b = cell(g_b, c_b)
        out_ref[t, :, 0:H] = h_f
        out_ref[tb, :, H:2 * H] = h_b
        return jnp.concatenate([h_f, h_b], axis=-1), c_f, c_b

    h2_0 = jnp.zeros((BB, 2 * H), jnp.float32)
    c0 = jnp.zeros((BB, H), jnp.float32)
    # unroll=2: gives the scheduler visibility to interleave the independent
    # forward / backward dependency chains across consecutive steps.
    lax.fori_loop(0, T, body, (h2_0, c0, c0), unroll=2)


def bilstm(x, p, block_b=8):
    """x: (B, T, D) float32 -> (B, T, 2H); matches nn.LSTM(bidirectional=True,
    batch_first=True) output[0] with zero initial state, 1 layer."""
    B, T, D = x.shape
    H = p["whh_f"].shape[0]

    # Pad batch to a multiple of the batch block (>= 8 sublanes); extra
    # all-zero sequences are nearly free in the latency-bound recurrence.
    BB = block_b
    Bp = _round_up(max(B, BB), BB)
    if Bp != B:
        x = jnp.pad(x, ((0, Bp - B), (0, 0), (0, 0)))

    # Input projection for BOTH directions hoisted out of the serial
    # recurrence as one big row/lane-tiled MXU matmul: (T*Bp, D) @ (D, 8H)+b.
    wih = jnp.concatenate([p["wih_f"], p["wih_b"]], axis=1)   # (D, 8H)
    bias = jnp.concatenate([p["b_f"], p["b_b"]], axis=1)      # (1, 8H)
    xt = jnp.transpose(x, (1, 0, 2))                          # (T, Bp, D)
    pg = matmul_bias(xt.reshape(T * Bp, D), wih, bias)        # (T*Bp, 8H)
    pg = pg.reshape(T, Bp, 8 * H)

    # Block-diagonal recurrent weight -> single fused per-step matmul.
    z = jnp.zeros((H, 4 * H), jnp.float32)
    whh_blk = jnp.concatenate(
        [jnp.concatenate([p["whh_f"], z], axis=1),
         jnp.concatenate([z, p["whh_b"]], axis=1)], axis=0)   # (2H, 8H)

    est = 2 * (T * BB * 8 * H * 4 + 2 * H * 8 * H * 4 + T * BB * 2 * H * 4)
    out = pl.pallas_call(
        _bilstm_rec_kernel,
        out_shape=jax.ShapeDtypeStruct((T, Bp, 2 * H), jnp.float32),
        grid=(Bp // BB,),
        in_specs=[
            pl.BlockSpec((T, BB, 8 * H), lambda i: (0, i, 0)),
            pl.BlockSpec((2 * H, 8 * H), lambda i: (0, 0)),
        ],
        out_specs=pl.BlockSpec((T, BB, 2 * H), lambda i: (0, i, 0)),
        compiler_params=_compiler_params(("parallel",), est),
    )(pg, whh_blk)                                            # (T, Bp, 2H)

    return jnp.transpose(out, (1, 0, 2))[:B]                  # (B, T, 2H)


# ----------------------------- model forward --------------------------------

def peng_2016_forward(params, args, data_input, task_id, method):
    assert method in ("domain_mask", "domain_trans")
    (chars, char_start, char_end), words = data_input
    B = chars.shape[0]
    Hc = args["char_rnn_hid"]
    Hw = args["word_rnn_hid"]
    tagset = args["tagset_size"]

    # ---- Base_Model forward (dropout = identity in eval mode) ----
    char_emb_out = params["char_emb"][chars]                      # (B, Tc, Dc)
    char_lstm_out = bilstm(char_emb_out, params["char_lstm"])     # (B, Tc, 2Hc)
    char_f = char_lstm_out[:, :, :Hc]
    char_b = char_lstm_out[:, :, Hc:]
    bidx = jnp.arange(B)[:, None]
    word_rep_f = char_f[bidx, char_end]                           # (B, Tw, Hc)
    word_rep_b = char_b[bidx, char_start]                         # (B, Tw, Hc)
    word_rep = jnp.concatenate([word_rep_f, word_rep_b], axis=2)  # (B, Tw, 2Hc)

    word_emb_out = params["word_emb"][words]                      # (B, Tw, Dw)
    pad_mask = (words != args["pad_word_idx"]).astype(jnp.float32)[..., None]
    word_rep = word_rep * pad_mask
    word_out = jnp.concatenate([word_emb_out, word_rep], axis=2)  # (B, Tw, Dw+2Hc)
    lstm_out = bilstm(word_out, params["word_lstm"])              # (B, Tw, 2Hw)

    Tw = lstm_out.shape[1]
    x2 = lstm_out.reshape(B * Tw, 2 * Hw)

    if method == "domain_mask":
        # NOTE: task_id must be a static Python int here (NumPy mask build).
        domain_width = int(Hw / (args["num_tasks"] + 1))
        shared_width = Hw - domain_width * args["num_tasks"]
        dm = np.zeros(2 * Hw, dtype=np.float32)
        dm[:shared_width] = 1
        dm[Hw:Hw + shared_width] = 1
        dm[shared_width + domain_width * task_id:
           shared_width + domain_width * (task_id + 1)] = 1
        dm[Hw + shared_width + domain_width * task_id:
           Hw + shared_width + domain_width * (task_id + 1)] = 1
        # Fold the mask into the CRF weight: (x*m) @ W == x @ (m[:,None]*W).
        masked_w = params["crf_w"] * jnp.asarray(dm)[:, None]     # (2Hw, K)
        scores = matmul_bias(x2, masked_w, params["crf_b"])
    else:
        # Fold the domain transform into the CRF weight:
        # (x @ T) @ W == x @ (T @ W); tiny one-time matmul outside the kernel.
        tm_w = jnp.dot(params["trans_mat"][task_id], params["crf_w"])
        scores = matmul_bias(x2, tm_w, params["crf_b"])

    # CRF_S: hidden2tag(feats).view(-1, tagset, tagset)
    return scores.reshape(-1, tagset, tagset)


# ----------------------------- param init -----------------------------------

def init_params(key, args, char_vocab, char_dim, word_vocab, word_dim):
    Hc, Hw = args["char_rnn_hid"], args["word_rnn_hid"]
    word_in = word_dim + 2 * Hc
    keys = jax.random.split(key, 17)

    def nrm(k, shape, scale=0.1):
        return (scale * jax.random.normal(k, shape)).astype(jnp.float32)

    return {
        "char_emb": nrm(keys[0], (char_vocab, char_dim), 1.0),
        "word_emb": nrm(keys[1], (word_vocab, word_dim), 1.0),
        "char_lstm": {
            "wih_f": nrm(keys[2], (char_dim, 4 * Hc)),
            "whh_f": nrm(keys[3], (Hc, 4 * Hc)),
            "b_f":   nrm(keys[4], (1, 4 * Hc)),
            "wih_b": nrm(keys[5], (char_dim, 4 * Hc)),
            "whh_b": nrm(keys[6], (Hc, 4 * Hc)),
            "b_b":   nrm(keys[7], (1, 4 * Hc)),
        },
        "word_lstm": {
            "wih_f": nrm(keys[8], (word_in, 4 * Hw)),
            "whh_f": nrm(keys[9], (Hw, 4 * Hw)),
            "b_f":   nrm(keys[10], (1, 4 * Hw)),
            "wih_b": nrm(keys[11], (word_in, 4 * Hw)),
            "whh_b": nrm(keys[12], (Hw, 4 * Hw)),
            "b_b":   nrm(keys[13], (1, 4 * Hw)),
        },
        # xavier_normal_-style init for the domain transformation matrices
        "trans_mat": nrm(keys[14], (args["num_tasks"], 2 * Hw, 2 * Hw),
                         float(np.sqrt(2.0 / (4 * Hw)))),
        "crf_w": nrm(keys[15], (2 * Hw, args["tagset_size"] ** 2)),
        "crf_b": jnp.zeros((1, args["tagset_size"] ** 2), jnp.float32),
    }


# ----------------------------- demo ------------------------------------------

if __name__ == "__main__":
    args = dict(char_rnn=True, word_rnn=True,
                char_rnn_hid=8, char_rnn_layers=1,
                word_rnn_hid=16, word_rnn_layers=1,
                dropout=0.5, pad_word_idx=0,
                num_tasks=2, tagset_size=5,
                fine_tune_char_emb=True, fine_tune_word_emb=True, cuda=False)

    B, Tc, Tw = 2, 12, 6
    char_vocab, char_dim = 20, 8
    word_vocab, word_dim = 30, 16

    key = jax.random.PRNGKey(0)
    kp, kc, kw, ks, ke = jax.random.split(key, 5)
    params = init_params(kp, args, char_vocab, char_dim, word_vocab, word_dim)

    chars = jax.random.randint(kc, (B, Tc), 1, char_vocab, dtype=jnp.int32)
    words = jax.random.randint(kw, (B, Tw), 0, word_vocab, dtype=jnp.int32)
    char_start = jax.random.randint(ks, (B, Tw), 0, Tc, dtype=jnp.int32)
    char_end = jax.random.randint(ke, (B, Tw), 0, Tc, dtype=jnp.int32)
    data_input = ((chars, char_start, char_end), words)

    out_mask = peng_2016_forward(params, args, data_input, task_id=1,
                                 method="domain_mask")
    out_trans = peng_2016_forward(params, args, data_input, task_id=0,
                                  method="domain_trans")
    jax.block_until_ready(out_mask)
    jax.block_until_ready(out_trans)
    assert out_mask.shape == (B * Tw, args["tagset_size"], args["tagset_size"])
    assert out_trans.shape == (B * Tw, args["tagset_size"], args["tagset_size"])
    print("KERNEL_OK")
</pallas_src>

<mosaic_0001>
module attributes {stable_mosaic.version = 11 : i64} {
  func.func @_matmul_bias_kernel(%arg0: i32, %arg1: i32, %arg2: memref<96x8xf32, #tpu.memory_space<vmem>>, %arg3: memref<8x128xbf16, #tpu.memory_space<vmem>>, %arg4: memref<1x128xf32, #tpu.memory_space<vmem>>, %arg5: memref<96x128xf32, #tpu.memory_space<vmem>>) attributes {dimension_semantics = [#tpu.dimension_semantics<parallel>, #tpu.dimension_semantics<parallel>], iteration_bounds = array<i64: 1, 1>, scalar_prefetch = 0 : i64, scratch_operands = 0 : i64, tpu.core_type = #tpu.core_type<tc>, window_params = [{transform_indices = @transform_0, window_bounds = array<i64: 96, 8>}, {transform_indices = @transform_1, window_bounds = array<i64: 8, 128>}, {transform_indices = @transform_2, window_bounds = array<i64: 1, 128>}, {transform_indices = @transform_3, window_bounds = array<i64: 96, 128>}]} {
    %c0 = arith.constant 0 : index
    %c0_0 = arith.constant 0 : index
    %0 = vector.load %arg2[%c0, %c0_0] : memref<96x8xf32, #tpu.memory_space<vmem>>, vector<96x8xf32>
    %1 = arith.truncf %0 : vector<96x8xf32> to vector<96x8xbf16>
    %c0_1 = arith.constant 0 : index
    %c0_2 = arith.constant 0 : index
    %2 = vector.load %arg3[%c0_1, %c0_2] : memref<8x128xbf16, #tpu.memory_space<vmem>>, vector<8x128xbf16>
    %cst = arith.constant dense<0.000000e+00> : vector<96x128xf32>
    %3 = tpu.matmul %1, %2, %cst {dimension_numbers = #tpu.dot_dimension_numbers<[1], [0], [0], [1], [0, 0, 1, 1], [], []>} : vector<96x8xbf16>, vector<8x128xbf16>, vector<96x128xf32> -> vector<96x128xf32>
    %c0_3 = arith.constant 0 : index
    %c0_4 = arith.constant 0 : index
    %4 = vector.load %arg4[%c0_3, %c0_4] : memref<1x128xf32, #tpu.memory_space<vmem>>, vector<1x128xf32>
    %5 = vector.broadcast %4 : vector<1x128xf32> to vector<96x128xf32>
    %6 = arith.addf %3, %5 : vector<96x128xf32>
    %c0_5 = arith.constant 0 : index
    %c0_6 = arith.constant 0 : index
    %7 = vector.load %arg5[%c0_5, %c0_6] : memref<96x128xf32, #tpu.memory_space<vmem>>, vector<96x128xf32>
    tpu.vector_store %arg5[%c0_5, %c0_6], %6 {strides = array<i32>} : memref<96x128xf32, #tpu.memory_space<vmem>>, vector<96x128xf32>,
    return
  }
  func.func @transform_0(%arg0: i32, %arg1: i32) -> (i32, i32) {
    %c0_i32 = arith.constant 0 : i32
    %c0_i32_0 = arith.constant 0 : i32
    return %arg0, %c0_i32 : i32, i32
  }
  func.func @transform_1(%arg0: i32, %arg1: i32) -> (i32, i32) {
    %c0_i32 = arith.constant 0 : i32
    %c0_i32_0 = arith.constant 0 : i32
    return %c0_i32, %arg1 : i32, i32
  }
  func.func @transform_2(%arg0: i32, %arg1: i32) -> (i32, i32) {
    %c0_i32 = arith.constant 0 : i32
    %c0_i32_0 = arith.constant 0 : i32
    return %c0_i32, %arg1 : i32, i32
  }
  func.func @transform_3(%arg0: i32, %arg1: i32) -> (i32, i32) {
    %c0_i32 = arith.constant 0 : i32
    return %arg0, %arg1 : i32, i32
  }
}

</mosaic_0001>

<llo_original>
// kernel: tpu_custom_call.1
$region0: #{tpu_custom_call.1}
  #allocation0 [shape = 'u32[]', space=smem, size = 0x4, offset = 0x4, fixed_abs, tag = 'smem constant byte address 0x4 - core index']
  #allocation1 [shape = 'u32[72,128]{1,0:T(1,128)}', space=vmem, size = 0x9000, scoped, tag = 'internal scratch']
  %s0 = inlined_call_operand.vmem [shape: f32[96,8], index: 0, kind: input, shape index: {}]
  %s1 = inlined_call_operand.vmem [shape: bf16[8,128], index: 1, kind: input, shape index: {}]
  %s2 = inlined_call_operand.vmem [shape: f32[1,128], index: 2, kind: input, shape index: {}]
  %s3 = inlined_call_operand.hbm [shape: f32[96,128], index: 3, kind: output, shape index: {}]
  %s4 = sld [smem:[#allocation0]]
  $region22: #{tpu_custom_call.1} parent=0
    _
  %s6 = ssub.s32 1, %s4
  %s7 = scalar_select 0, %s6, %s4
  $region1: #{tpu_custom_call.1} parent=0
    #allocation2 [shape = 'u8[49152]{0}', space=vmem, size = 0xc000, scoped, tag = 'output window, operand 0, single buffered']
    #allocation3 [shape = 's32[1]{0}', space=sflag, size = 0x4, scoped, tag = 'scoped memory for tpu_custom_call.1']
    %8 = vsyncpa [#allocation3], 0
    // Predicated region
    $region2: #{tpu_custom_call.1} parent=1 // pred_check
      _
    $region3: #{tpu_custom_call.1} parent=1 // pred_check_branch
      %10 = sbr.rel (0) target = $region5
    $region4: #{tpu_custom_call.1} parent=1 // pred_region
      _
    $region5: #{tpu_custom_call.1} parent=1 // pred_fallthru
      _
    // Predicated region
    $region6: #{tpu_custom_call.1} parent=1 // pred_check
      _
    $region7: #{tpu_custom_call.1} parent=1 // pred_check_branch
      %12 = sbr.rel (0) target = $region9
    $region8: #{tpu_custom_call.1} parent=1 // pred_region
      _
    $region9: #{tpu_custom_call.1} parent=1 // pred_fallthru
      _
    // Predicated region
    $region10: #{tpu_custom_call.1} parent=1 // pred_check
      _
    $region11: #{tpu_custom_call.1} parent=1 // pred_check_branch
      %14 = sbr.rel (0) target = $region13
    $region12: #{tpu_custom_call.1} parent=1 // pred_region
      _
    $region13: #{tpu_custom_call.1} parent=1 // pred_fallthru
      _
    %v16 = vld [vmem:[%s0] sm:$0xff]
    %v17 = vld [vmem:[%s0 + $0x8] sm:$0xff]
    %v18 = vld [vmem:[%s0 + $0x10] sm:$0xff]
    %v19 = vld [vmem:[%s0 + $0x18] sm:$0xff]
    %v20 = vld [vmem:[%s0 + $0x20] sm:$0xff]
    %v21 = vld [vmem:[%s0 + $0x28] sm:$0xff]
    %v22 = vld [vmem:[%s0 + $0x30] sm:$0xff]
    %v23 = vld [vmem:[%s0 + $0x38] sm:$0xff]
    %v24 = vld [vmem:[%s0 + $0x40] sm:$0xff]
    %v25 = vld [vmem:[%s0 + $0x48] sm:$0xff]
    %v26 = vld [vmem:[%s0 + $0x50] sm:$0xff]
    %v27 = vld [vmem:[%s0 + $0x58] sm:$0xff]
    %v28 = vpack.c.bf16 %v17, %v16
    %v29 = vpack.c.bf16 %v19, %v18
    %v30 = vpack.c.bf16 %v21, %v20
    %v31 = vpack.c.bf16 %v23, %v22
    %v32 = vpack.c.bf16 %v25, %v24
    %v33 = vpack.c.bf16 %v27, %v26
    %v34 = vld [vmem:[%s1] sm:$0xf]
    %v35 = vld [vmem:[%s2] sm:$0x1]
    %v37 = vperm.slane %v35, 0
    %vm39 = vcmask 64512
    %v41 = vsel %vm39, %v28, 0
    %v44 = vsel %vm39, %v29, 0
    %v47 = vsel %vm39, %v30, 0
    %v50 = vsel %vm39, %v31, 0
    %v53 = vsel %vm39, %v32, 0
    %v56 = vsel %vm39, %v33, 0
    %vm58 = vcmask 1043456
    %v60 = vsel %vm58, %v34, 0
    %62 = vmatpush.bf16.msra.mxu0 0
    %63 = vmatpush.bf16.msra.mxu0 0
    %64 = vmatpush.bf16.msra.mxu0 0
    %65 = vmatpush.bf16.msra.mxu0 0
    %66 = vmatpush.bf16.msra.mxu0 0
    %67 = vmatpush.bf16.msra.mxu0 0
    %68 = vmatpush.bf16.msra.mxu0 0
    %69 = vmatpush.bf16.msra.mxu0 %v60
    %70 = vmatmul.bf16.gmra.mxu0 %v41
    %v71 = vpop.f32.mrf.mxu0
    %v72 = vadd.f32 %v37, %v71
    %v73 = vpop.f32.mrf.mxu0
    %v74 = vadd.f32 %v37, %v73
    %75 = vmatmul.bf16.gmra.mxu0 %v44
    %v76 = vpop.f32.mrf.mxu0
    %v77 = vadd.f32 %v37, %v76
    %v78 = vpop.f32.mrf.mxu0
    %v79 = vadd.f32 %v37, %v78
    %80 = vmatmul.bf16.gmra.mxu0 %v47
    %v81 = vpop.f32.mrf.mxu0
    %v82 = vadd.f32 %v37, %v81
    %v83 = vpop.f32.mrf.mxu0
    %v84 = vadd.f32 %v37, %v83
    %85 = vmatmul.bf16.gmra.mxu0 %v50
    %v86 = vpop.f32.mrf.mxu0
    %v87 = vadd.f32 %v37, %v86
    %v88 = vpop.f32.mrf.mxu0
    %v89 = vadd.f32 %v37, %v88
    %90 = vmatmul.bf16.gmra.mxu0 %v53
    %v91 = vpop.f32.mrf.mxu0
    %v92 = vadd.f32 %v37, %v91
    %v93 = vpop.f32.mrf.mxu0
    %v94 = vadd.f32 %v37, %v93
    %95 = vmatmul.bf16.gmra.mxu0 %v56
    %v96 = vpop.f32.mrf.mxu0
    %v97 = vadd.f32 %v37, %v96
    %v98 = vpop.f32.mrf.mxu0
    %v99 = vadd.f32 %v37, %v98
    %100 = vdwg.mxu0
    %101 = vst [vmem:[#allocation2] sm:$0xff] %v72
    %102 = vst [vmem:[#allocation2 + $0x8] sm:$0xff] %v74
    %103 = vst [vmem:[#allocation2 + $0x10] sm:$0xff] %v77
    %104 = vst [vmem:[#allocation2 + $0x18] sm:$0xff] %v79
    %105 = vst [vmem:[#allocation2 + $0x20] sm:$0xff] %v82
    %106 = vst [vmem:[#allocation2 + $0x28] sm:$0xff] %v84
    %107 = vst [vmem:[#allocation2 + $0x30] sm:$0xff] %v87
    %108 = vst [vmem:[#allocation2 + $0x38] sm:$0xff] %v89
    %109 = vst [vmem:[#allocation2 + $0x40] sm:$0xff] %v92
    %110 = vst [vmem:[#allocation2 + $0x48] sm:$0xff] %v94
    %111 = vst [vmem:[#allocation2 + $0x50] sm:$0xff] %v97
    %112 = vst [vmem:[#allocation2 + $0x58] sm:$0xff] %v99
    // Predicated region
    $region14: #{tpu_custom_call.1} parent=1 // pred_check
      _
    $region15: #{tpu_custom_call.1} parent=1 // pred_check_branch
      %114 = sbr.rel (0) target = $region17
    $region16: #{tpu_custom_call.1} parent=1 // pred_region
      %116 = vsyncadd [#allocation3], 0
      %s117 = sshll.u32 [#allocation2], 4
      %s118 = int_to_ptr.vmem [resolvable:$true] %s117
      %s119 = sshll.u32 %s3, 4
      %s120 = int_to_ptr.hbm [resolvable:$true] %s119
      %125 = dma.vmem_to_hbm [thread:$0]  %s118, 1536, %s120, [#allocation3], 128, 128, 8
    $region17: #{tpu_custom_call.1} parent=1 // pred_fallthru
      _
    // Predicated region
    $region18: #{tpu_custom_call.1} parent=1 // pred_check
      _
    $region19: #{tpu_custom_call.1} parent=1 // pred_check_branch
      %127 = sbr.rel (0) target = $region21
    $region20: #{tpu_custom_call.1} parent=1 // pred_region
      %129 = dma.done [#allocation3], 1536
    $region21: #{tpu_custom_call.1} parent=1 // pred_fallthru
      _
    %130 = vsyncpa [#allocation3], 1

</llo_original>
